<compile_context>
chip_gen: v7x
topology: tpu7x:2x2x1
jax: 0.10.0
libtpu: 0.0.40
codegen_flags: <defaults>
</compile_context>

<pallas_src>
import functools

import jax
import jax.numpy as jnp
from jax.experimental import pallas as pl
from jax.experimental.pallas import tpu as pltpu

_LANE = 128
_SUBLANE = 8
_MAX_TM = 2048        # rows per batch tile (per-step VMEM is ~1-2 MiB, tiny)
_SPLIT_THRESHOLD = 128  # above this, force >=2 grid steps (v7x megacore)


def _round_up(x, m):
    return (x + m - 1) // m * m


def _cdiv(a, b):
    return -(-a // b)


def _mlp_body(x, w1, b1, w2, b2, w3, b3, w4, b4):
    """tanh(tanh(tanh(xW1+b1)W2+b2)W3+b3)W4+b4 with f32 accumulation."""
    h = jnp.tanh(jnp.dot(x, w1, preferred_element_type=jnp.float32) + b1)
    h = jnp.tanh(jnp.dot(h, w2, preferred_element_type=jnp.float32) + b2)
    # The x.view(-1, hidden_size) in the torch reference is a no-op reshape
    # here: h is already (tile, hidden).
    h = jnp.tanh(jnp.dot(h, w3, preferred_element_type=jnp.float32) + b3)
    return jnp.dot(h, w4, preferred_element_type=jnp.float32) + b4


def _q_kernel(x_ref, w1_ref, b1_ref, w2_ref, b2_ref, w3_ref, b3_ref,
              w4_ref, b4_ref, q_ref):
    q = _mlp_body(x_ref[...],
                  w1_ref[...], b1_ref[...],
                  w2_ref[...], b2_ref[...],
                  w3_ref[...], b3_ref[...],
                  w4_ref[...], b4_ref[...])
    q_ref[...] = q.astype(q_ref.dtype)


def _q_gather_kernel(x_ref, action_ref, w1_ref, b1_ref, w2_ref, b2_ref,
                     w3_ref, b3_ref, w4_ref, b4_ref, qa_ref):
    q = _mlp_body(x_ref[...],
                  w1_ref[...], b1_ref[...],
                  w2_ref[...], b2_ref[...],
                  w3_ref[...], b3_ref[...],
                  w4_ref[...], b4_ref[...])
    # Fused gather: one-hot select of the action column, reduced along lanes.
    col = jax.lax.broadcasted_iota(jnp.int32, q.shape, 1)
    onehot = (col == action_ref[...]).astype(q.dtype)        # (tm, 1) broadcasts
    qa = jnp.sum(q * onehot, axis=1, keepdims=True)          # (tm, 1)
    # Lane-dense store: relayout the per-row column onto lanes (one XLU
    # transpose/reshape) -> one contiguous (1, tm) vst instead of tm masked
    # single-lane stores.
    qa_ref[...] = qa.reshape(1, -1).astype(qa_ref.dtype)


def _resident(shape):
    # Same block index every grid step -> stays VMEM-resident, no re-DMA.
    return pl.BlockSpec(tuple(shape), lambda i: (0, 0))


def _batch_tiling(batch):
    """Pick (tile_rows, padded_batch).

    batch <= 128: single tile rounded to the sublane (8) -- splitting tiny
    batches would force 128-row tiles (lane-dense gather output) and the
    per-step overhead would outweigh any megacore gain.
    batch  > 128: >= 2 grid steps (v7x shards them across both TensorCores),
    tm a multiple of 128 (keeps the gather output block lane-dense), capped at
    _MAX_TM, with the step count chosen to limit padded-tile waste."""
    if batch <= _SPLIT_THRESHOLD:
        tm = _round_up(max(batch, 1), _SUBLANE)
        return tm, tm
    steps = max(2, _cdiv(batch, _MAX_TM))
    tm = _round_up(_cdiv(batch, steps), _LANE)
    padded_batch = _round_up(batch, tm)
    return tm, padded_batch


_COMPILER_PARAMS = pltpu.CompilerParams(
    dimension_semantics=("parallel",),          # shard batch grid across TCs
    vmem_limit_bytes=32 * 1024 * 1024,          # explicit: safe on v7x 64 MiB
)


def prepare_params(params):
    """Pad weights/biases ONCE to lane-dense (multiple-of-128) feature dims.

    Hoisted out of the jitted forwards: previously 8 jnp.pad ops re-read and
    re-materialized every weight/bias in HBM on every call."""
    hidden = params["w1"].shape[1]
    n_output = params["w4"].shape[1]
    n_input = params["w1"].shape[0]
    hidden_pad = _round_up(hidden, _LANE)
    n_out_pad = _round_up(n_output, _LANE)

    def pad2(a, rows, cols):
        a = jnp.asarray(a, jnp.float32)
        return jnp.pad(a, ((0, rows - a.shape[0]), (0, cols - a.shape[1])))

    return (pad2(params["w1"], n_input, hidden_pad),
            pad2(params["b1"], 1, hidden_pad),
            pad2(params["w2"], hidden_pad, hidden_pad),
            pad2(params["b2"], 1, hidden_pad),
            pad2(params["w3"], hidden_pad, hidden_pad),
            pad2(params["b3"], 1, hidden_pad),
            pad2(params["w4"], hidden_pad, n_out_pad),
            pad2(params["b4"], 1, n_out_pad))


@functools.partial(jax.jit, static_argnames=("n_output",))
def _forward_q(x, padded, *, n_output):
    w1, b1, w2, b2, w3, b3, w4, b4 = padded
    batch, n_input = x.shape
    n_out_pad = w4.shape[1]

    tm, pb = _batch_tiling(batch)
    x_p = jnp.pad(x.astype(jnp.float32), ((0, pb - batch), (0, 0)))

    q_p = pl.pallas_call(
        _q_kernel,
        out_shape=jax.ShapeDtypeStruct((pb, n_out_pad), jnp.float32),
        grid=(pb // tm,),
        in_specs=[
            pl.BlockSpec((tm, n_input), lambda i: (i, 0)),
            _resident(w1.shape), _resident(b1.shape),
            _resident(w2.shape), _resident(b2.shape),
            _resident(w3.shape), _resident(b3.shape),
            _resident(w4.shape), _resident(b4.shape),
        ],
        out_specs=pl.BlockSpec((tm, n_out_pad), lambda i: (i, 0)),
        compiler_params=_COMPILER_PARAMS,
    )(x_p, w1, b1, w2, b2, w3, b3, w4, b4)
    return q_p[:batch, :n_output]


@jax.jit
def _forward_q_gathered(x, padded, action):
    w1, b1, w2, b2, w3, b3, w4, b4 = padded
    batch, n_input = x.shape

    tm, pb = _batch_tiling(batch)
    x_p = jnp.pad(x.astype(jnp.float32), ((0, pb - batch), (0, 0)))
    a_p = jnp.pad(action.astype(jnp.int32).reshape(batch, 1),
                  ((0, pb - batch), (0, 0)))

    qa_p = pl.pallas_call(
        _q_gather_kernel,
        # Lane-dense output slab: (1, pb) row written as (1, tm) blocks along
        # the lane axis (tm is a multiple of 128 whenever the grid has >1 step).
        out_shape=jax.ShapeDtypeStruct((1, pb), jnp.float32),
        grid=(pb // tm,),
        in_specs=[
            pl.BlockSpec((tm, n_input), lambda i: (i, 0)),
            pl.BlockSpec((tm, 1), lambda i: (i, 0)),
            _resident(w1.shape), _resident(b1.shape),
            _resident(w2.shape), _resident(b2.shape),
            _resident(w3.shape), _resident(b3.shape),
            _resident(w4.shape), _resident(b4.shape),
        ],
        out_specs=pl.BlockSpec((1, tm), lambda i: (0, i)),
        compiler_params=_COMPILER_PARAMS,
    )(x_p, a_p, w1, b1, w2, b2, w3, b3, w4, b4)
    return qa_p[0, :batch]


class NN10LayersPallas:
    """Pallas-TPU fused forward matching NN10Layers.forward semantics."""

    def __init__(self, params):
        self.hidden_size = int(params["w1"].shape[1])
        self.n_output = int(params["w4"].shape[1])
        self._padded = prepare_params(params)   # pad once, outside the forward
        # TODO(synk): torch's _collect_qs / retrieve_qs host-side Q-value
        # logging (Python list mutation) has no Pallas equivalent.

    def __call__(self, x, action=None):
        if action is None:
            return _forward_q(x, self._padded, n_output=self.n_output)
        qa = _forward_q_gathered(x, self._padded, action)      # (batch,)
        # torch.squeeze(): removes all size-1 dims (batch==1 -> 0-d scalar).
        return jnp.squeeze(qa)


def init_params(key, n_input, hidden_size, n_output):
    """PyTorch nn.Linear-style init (uniform +/- 1/sqrt(fan_in)).

    Weights stored pre-transposed as (in_features, out_features); biases (1, out)."""
    dims = [(n_input, hidden_size),
            (hidden_size, hidden_size),
            (hidden_size, hidden_size),
            (hidden_size, n_output)]
    params = {}
    for i, (fan_in, fan_out) in enumerate(dims, start=1):
        key, kw, kb = jax.random.split(key, 3)
        bound = 1.0 / jnp.sqrt(jnp.float32(fan_in))
        params[f"w{i}"] = jax.random.uniform(
            kw, (fan_in, fan_out), jnp.float32, minval=-bound, maxval=bound)
        params[f"b{i}"] = jax.random.uniform(
            kb, (1, fan_out), jnp.float32, minval=-bound, maxval=bound)
    return params


if __name__ == "__main__":
    key = jax.random.PRNGKey(0)

    batch = 2
    n_input = 4        # input_shape[0]
    hidden_size = 32
    n_output = 8       # output_shape[0]

    kx, ka, kp = jax.random.split(key, 3)
    x = jax.random.normal(kx, (batch, n_input), dtype=jnp.float32)
    params = init_params(kp, n_input, hidden_size, n_output)

    model = NN10LayersPallas(params)

    # Q-values path (action=None)
    q = model(x)
    q = jax.block_until_ready(q)
    assert q.shape == (batch, n_output), q.shape

    # Fused action-gather path
    action = jax.random.randint(ka, (batch, 1), 0, n_output)
    q_acted = model(x, action=action)
    q_acted = jax.block_until_ready(q_acted)
    assert q_acted.shape == (batch,), q_acted.shape

    # Sanity check against plain-JAX reference of the same math.
    def ref(x, p):
        h = jnp.tanh(x @ p["w1"] + p["b1"])
        h = jnp.tanh(h @ p["w2"] + p["b2"])
        h = jnp.tanh(h.reshape(-1, hidden_size) @ p["w3"] + p["b3"])
        return h @ p["w4"] + p["b4"]

    q_ref = ref(x, params)
    assert jnp.allclose(q, q_ref, atol=1e-5, rtol=1e-5)

    q_acted_ref = jnp.squeeze(
        jnp.take_along_axis(q_ref, action.astype(jnp.int32), axis=1))
    assert jnp.allclose(q_acted, q_acted_ref, atol=1e-5, rtol=1e-5)

    print("KERNEL_OK")
</pallas_src>

<mosaic_0001>
module attributes {stable_mosaic.version = 11 : i64} {
  func.func @_q_kernel(%arg0: i32, %arg1: memref<8x4xf32, #tpu.memory_space<vmem>>, %arg2: memref<4x128xf32, #tpu.memory_space<vmem>>, %arg3: memref<1x128xf32, #tpu.memory_space<vmem>>, %arg4: memref<128x128xf32, #tpu.memory_space<vmem>>, %arg5: memref<1x128xf32, #tpu.memory_space<vmem>>, %arg6: memref<128x128xf32, #tpu.memory_space<vmem>>, %arg7: memref<1x128xf32, #tpu.memory_space<vmem>>, %arg8: memref<128x128xf32, #tpu.memory_space<vmem>>, %arg9: memref<1x128xf32, #tpu.memory_space<vmem>>, %arg10: memref<8x128xf32, #tpu.memory_space<vmem>>) attributes {dimension_semantics = [#tpu.dimension_semantics<parallel>], iteration_bounds = array<i64: 1>, scalar_prefetch = 0 : i64, scratch_operands = 0 : i64, tpu.core_type = #tpu.core_type<tc>, window_params = [{transform_indices = @transform_0, window_bounds = array<i64: 8, 4>}, {pipeline_mode = #tpu.pipeline_mode<synchronous>, transform_indices = @transform_1, window_bounds = array<i64: 4, 128>}, {pipeline_mode = #tpu.pipeline_mode<synchronous>, transform_indices = @transform_2, window_bounds = array<i64: 1, 128>}, {pipeline_mode = #tpu.pipeline_mode<synchronous>, transform_indices = @transform_3, window_bounds = array<i64: 128, 128>}, {pipeline_mode = #tpu.pipeline_mode<synchronous>, transform_indices = @transform_4, window_bounds = array<i64: 1, 128>}, {pipeline_mode = #tpu.pipeline_mode<synchronous>, transform_indices = @transform_5, window_bounds = array<i64: 128, 128>}, {pipeline_mode = #tpu.pipeline_mode<synchronous>, transform_indices = @transform_6, window_bounds = array<i64: 1, 128>}, {pipeline_mode = #tpu.pipeline_mode<synchronous>, transform_indices = @transform_7, window_bounds = array<i64: 128, 128>}, {pipeline_mode = #tpu.pipeline_mode<synchronous>, transform_indices = @transform_8, window_bounds = array<i64: 1, 128>}, {transform_indices = @transform_9, window_bounds = array<i64: 8, 128>}]} {
    %c0 = arith.constant 0 : index
    %c0_0 = arith.constant 0 : index
    %0 = vector.load %arg1[%c0, %c0_0] : memref<8x4xf32, #tpu.memory_space<vmem>>, vector<8x4xf32>
    %c0_1 = arith.constant 0 : index
    %c0_2 = arith.constant 0 : index
    %1 = vector.load %arg2[%c0_1, %c0_2] : memref<4x128xf32, #tpu.memory_space<vmem>>, vector<4x128xf32>
    %c0_3 = arith.constant 0 : index
    %c0_4 = arith.constant 0 : index
    %2 = vector.load %arg3[%c0_3, %c0_4] : memref<1x128xf32, #tpu.memory_space<vmem>>, vector<1x128xf32>
    %c0_5 = arith.constant 0 : index
    %c0_6 = arith.constant 0 : index
    %3 = vector.load %arg4[%c0_5, %c0_6] : memref<128x128xf32, #tpu.memory_space<vmem>>, vector<128x128xf32>
    %c0_7 = arith.constant 0 : index
    %c0_8 = arith.constant 0 : index
    %4 = vector.load %arg5[%c0_7, %c0_8] : memref<1x128xf32, #tpu.memory_space<vmem>>, vector<1x128xf32>
    %c0_9 = arith.constant 0 : index
    %c0_10 = arith.constant 0 : index
    %5 = vector.load %arg6[%c0_9, %c0_10] : memref<128x128xf32, #tpu.memory_space<vmem>>, vector<128x128xf32>
    %c0_11 = arith.constant 0 : index
    %c0_12 = arith.constant 0 : index
    %6 = vector.load %arg7[%c0_11, %c0_12] : memref<1x128xf32, #tpu.memory_space<vmem>>, vector<1x128xf32>
    %c0_13 = arith.constant 0 : index
    %c0_14 = arith.constant 0 : index
    %7 = vector.load %arg8[%c0_13, %c0_14] : memref<128x128xf32, #tpu.memory_space<vmem>>, vector<128x128xf32>
    %c0_15 = arith.constant 0 : index
    %c0_16 = arith.constant 0 : index
    %8 = vector.load %arg9[%c0_15, %c0_16] : memref<1x128xf32, #tpu.memory_space<vmem>>, vector<1x128xf32>
    %cst = arith.constant dense<0.000000e+00> : vector<8x128xf32>
    %9 = tpu.matmul %0, %1, %cst {dimension_numbers = #tpu.dot_dimension_numbers<[1], [0], [0], [1], [0, 0, 1, 1], [], []>} : vector<8x4xf32>, vector<4x128xf32>, vector<8x128xf32> -> vector<8x128xf32>
    %10 = vector.broadcast %2 : vector<1x128xf32> to vector<8x128xf32>
    %11 = arith.addf %9, %10 : vector<8x128xf32>
    %12 = math.tanh %11 : vector<8x128xf32>
    %cst_17 = arith.constant dense<0.000000e+00> : vector<8x128xf32>
    %13 = tpu.matmul %12, %3, %cst_17 {dimension_numbers = #tpu.dot_dimension_numbers<[1], [0], [0], [1], [0, 0, 1, 1], [], []>} : vector<8x128xf32>, vector<128x128xf32>, vector<8x128xf32> -> vector<8x128xf32>
    %14 = vector.broadcast %4 : vector<1x128xf32> to vector<8x128xf32>
    %15 = arith.addf %13, %14 : vector<8x128xf32>
    %16 = math.tanh %15 : vector<8x128xf32>
    %cst_18 = arith.constant dense<0.000000e+00> : vector<8x128xf32>
    %17 = tpu.matmul %16, %5, %cst_18 {dimension_numbers = #tpu.dot_dimension_numbers<[1], [0], [0], [1], [0, 0, 1, 1], [], []>} : vector<8x128xf32>, vector<128x128xf32>, vector<8x128xf32> -> vector<8x128xf32>
    %18 = vector.broadcast %6 : vector<1x128xf32> to vector<8x128xf32>
    %19 = arith.addf %17, %18 : vector<8x128xf32>
    %20 = math.tanh %19 : vector<8x128xf32>
    %cst_19 = arith.constant dense<0.000000e+00> : vector<8x128xf32>
    %21 = tpu.matmul %20, %7, %cst_19 {dimension_numbers = #tpu.dot_dimension_numbers<[1], [0], [0], [1], [0, 0, 1, 1], [], []>} : vector<8x128xf32>, vector<128x128xf32>, vector<8x128xf32> -> vector<8x128xf32>
    %22 = vector.broadcast %8 : vector<1x128xf32> to vector<8x128xf32>
    %23 = arith.addf %21, %22 : vector<8x128xf32>
    %c0_20 = arith.constant 0 : index
    %c0_21 = arith.constant 0 : index
    %24 = vector.load %arg10[%c0_20, %c0_21] : memref<8x128xf32, #tpu.memory_space<vmem>>, vector<8x128xf32>
    tpu.vector_store %arg10[%c0_20, %c0_21], %23 {strides = array<i32>} : memref<8x128xf32, #tpu.memory_space<vmem>>, vector<8x128xf32>,
    return
  }
  func.func @transform_0(%arg0: i32) -> (i32, i32) {
    %c0_i32 = arith.constant 0 : i32
    %c0_i32_0 = arith.constant 0 : i32
    return %arg0, %c0_i32 : i32, i32
  }
  func.func @transform_1(%arg0: i32) -> (i32, i32) {
    %c0_i32 = arith.constant 0 : i32
    %c0_i32_0 = arith.constant 0 : i32
    %c0_i32_1 = arith.constant 0 : i32
    return %c0_i32, %c0_i32_0 : i32, i32
  }
  func.func @transform_2(%arg0: i32) -> (i32, i32) {
    %c0_i32 = arith.constant 0 : i32
    %c0_i32_0 = arith.constant 0 : i32
    %c0_i32_1 = arith.constant 0 : i32
    return %c0_i32, %c0_i32_0 : i32, i32
  }
  func.func @transform_3(%arg0: i32) -> (i32, i32) {
    %c0_i32 = arith.constant 0 : i32
    %c0_i32_0 = arith.constant 0 : i32
    %c0_i32_1 = arith.constant 0 : i32
    return %c0_i32, %c0_i32_0 : i32, i32
  }
  func.func @transform_4(%arg0: i32) -> (i32, i32) {
    %c0_i32 = arith.constant 0 : i32
    %c0_i32_0 = arith.constant 0 : i32
    %c0_i32_1 = arith.constant 0 : i32
    return %c0_i32, %c0_i32_0 : i32, i32
  }
  func.func @transform_5(%arg0: i32) -> (i32, i32) {
    %c0_i32 = arith.constant 0 : i32
    %c0_i32_0 = arith.constant 0 : i32
    %c0_i32_1 = arith.constant 0 : i32
    return %c0_i32, %c0_i32_0 : i32, i32
  }
  func.func @transform_6(%arg0: i32) -> (i32, i32) {
    %c0_i32 = arith.constant 0 : i32
    %c0_i32_0 = arith.constant 0 : i32
    %c0_i32_1 = arith.constant 0 : i32
    return %c0_i32, %c0_i32_0 : i32, i32
  }
  func.func @transform_7(%arg0: i32) -> (i32, i32) {
    %c0_i32 = arith.constant 0 : i32
    %c0_i32_0 = arith.constant 0 : i32
    %c0_i32_1 = arith.constant 0 : i32
    return %c0_i32, %c0_i32_0 : i32, i32
  }
  func.func @transform_8(%arg0: i32) -> (i32, i32) {
    %c0_i32 = arith.constant 0 : i32
    %c0_i32_0 = arith.constant 0 : i32
    %c0_i32_1 = arith.constant 0 : i32
    return %c0_i32, %c0_i32_0 : i32, i32
  }
  func.func @transform_9(%arg0: i32) -> (i32, i32) {
    %c0_i32 = arith.constant 0 : i32
    %c0_i32_0 = arith.constant 0 : i32
    return %arg0, %c0_i32 : i32, i32
  }
}

</mosaic_0001>

<llo_original>
// kernel: _forward_q.1
$region0: #{_forward_q.1}
  #allocation0 [shape = 'u32[]', space=smem, size = 0x4, offset = 0x4, fixed_abs, tag = 'smem constant byte address 0x4 - core index']
  #allocation1 [shape = 'u32[144,128]{1,0:T(1,128)}', space=vmem, size = 0x12000, scoped, tag = 'internal scratch']
  %s0 = inlined_call_operand.vmem [shape: f32[8,4], index: 0, kind: input, shape index: {}]
  %s1 = inlined_call_operand.vmem [shape: f32[4,128], index: 1, kind: input, shape index: {}]
  %s2 = inlined_call_operand.vmem [shape: f32[1,128], index: 2, kind: input, shape index: {}]
  %s3 = inlined_call_operand.hbm [shape: f32[128,128], index: 3, kind: input, shape index: {}]
  %s4 = inlined_call_operand.vmem [shape: f32[1,128], index: 4, kind: input, shape index: {}]
  %s5 = inlined_call_operand.hbm [shape: f32[128,128], index: 5, kind: input, shape index: {}]
  %s6 = inlined_call_operand.vmem [shape: f32[1,128], index: 6, kind: input, shape index: {}]
  %s7 = inlined_call_operand.hbm [shape: f32[128,128], index: 7, kind: input, shape index: {}]
  %s8 = inlined_call_operand.vmem [shape: f32[1,128], index: 8, kind: input, shape index: {}]
  %s9 = inlined_call_operand.vmem [shape: f32[8,128], index: 9, kind: output, shape index: {}]
  %s10 = sld [smem:[#allocation0]]
  $region58: #{_forward_q.1} parent=0
    _
  %s12 = ssub.s32 1, %s10
  %s13 = scalar_select 0, %s12, %s10
  $region1: #{_forward_q.1} parent=0
    #allocation2 [shape = 'u8[65536]{0}', space=vmem, size = 0x10000, scoped, tag = 'input window, operand 3, single buffered']
    #allocation3 [shape = 's32[1]{0}', space=sflag, size = 0x4, scoped, tag = 'scoped memory for _forward_q.1']
    #allocation4 [shape = 'u8[65536]{0}', space=vmem, size = 0x10000, scoped, tag = 'input window, operand 5, single buffered']
    #allocation5 [shape = 's32[1]{0}', space=sflag, size = 0x4, scoped, tag = 'scoped memory for _forward_q.1']
    #allocation6 [shape = 'u8[65536]{0}', space=vmem, size = 0x10000, scoped, tag = 'input window, operand 7, single buffered']
    %14 = vsyncpa [#allocation3], 0
    %15 = vsyncpa [#allocation5], 0
    // Predicated region
    $region2: #{_forward_q.1} parent=1 // pred_check
      _
    $region3: #{_forward_q.1} parent=1 // pred_check_branch
      %17 = sbr.rel (0) target = $region5
    $region4: #{_forward_q.1} parent=1 // pred_region
      _
    $region5: #{_forward_q.1} parent=1 // pred_fallthru
      _
    // Predicated region
    $region6: #{_forward_q.1} parent=1 // pred_check
      _
    $region7: #{_forward_q.1} parent=1 // pred_check_branch
      %19 = sbr.rel (0) target = $region9
    $region8: #{_forward_q.1} parent=1 // pred_region
      _
    $region9: #{_forward_q.1} parent=1 // pred_fallthru
      _
    // Predicated region
    $region10: #{_forward_q.1} parent=1 // pred_check
      _
    $region11: #{_forward_q.1} parent=1 // pred_check_branch
      %21 = sbr.rel (0) target = $region13
    $region12: #{_forward_q.1} parent=1 // pred_region
      _
    $region13: #{_forward_q.1} parent=1 // pred_fallthru
      _
    // Predicated region
    $region14: #{_forward_q.1} parent=1 // pred_check
      _
    $region15: #{_forward_q.1} parent=1 // pred_check_branch
      %23 = sbr.rel (0) target = $region17
    $region16: #{_forward_q.1} parent=1 // pred_region
      %s25 = ssub.s32 2048, 2048
      %26 = vsyncadd [#allocation3], %s25
      %s27 = sshll.u32 [#allocation2], 4
      %s28 = int_to_ptr.vmem [resolvable:$true] %s27
      %33 = dma.hbm_to_vmem [thread:$0]  %s3, 2048, %s28, [#allocation3], 128, 128, 8
    $region17: #{_forward_q.1} parent=1 // pred_fallthru
      _
    // Predicated region
    $region18: #{_forward_q.1} parent=1 // pred_check
      _
    $region19: #{_forward_q.1} parent=1 // pred_check_branch
      %35 = sbr.rel (0) target = $region21
    $region20: #{_forward_q.1} parent=1 // pred_region
      _
    $region21: #{_forward_q.1} parent=1 // pred_fallthru
      _
    // Predicated region
    $region22: #{_forward_q.1} parent=1 // pred_check
      _
    $region23: #{_forward_q.1} parent=1 // pred_check_branch
      %37 = sbr.rel (0) target = $region25
    $region24: #{_forward_q.1} parent=1 // pred_region
      %s39 = ssub.s32 2048, 2048
      %40 = vsyncadd [#allocation5], %s39
      %s41 = sshll.u32 [#allocation4], 4
      %s42 = int_to_ptr.vmem [resolvable:$true] %s41
      %47 = dma.hbm_to_vmem [thread:$0]  %s5, 2048, %s42, [#allocation5], 128, 128, 8
    $region25: #{_forward_q.1} parent=1 // pred_fallthru
      _
    // Predicated region
    $region26: #{_forward_q.1} parent=1 // pred_check
      _
    $region27: #{_forward_q.1} parent=1 // pred_check_branch
      %49 = sbr.rel (0) target = $region29
    $region28: #{_forward_q.1} parent=1 // pred_region
      _
    $region29: #{_forward_q.1} parent=1 // pred_fallthru
      _
    // Predicated region
    $region30: #{_forward_q.1} parent=1 // pred_check
      _
    $region31: #{_forward_q.1} parent=1 // pred_check_branch
      %51 = sbr.rel (0) target = $region33
    $region32: #{_forward_q.1} parent=1 // pred_region
      %s53 = ssub.s32 2048, 2048
      %54 = vsyncadd [#allocation5], %s53
      %s55 = sshll.u32 [#allocation6], 4
      %s56 = int_to_ptr.vmem [resolvable:$true] %s55
      %61 = dma.hbm_to_vmem [thread:$0]  %s7, 2048, %s56, [#allocation5], 128, 128, 8
    $region33: #{_forward_q.1} parent=1 // pred_fallthru
      _
    // Predicated region
    $region34: #{_forward_q.1} parent=1 // pred_check
      _
    $region35: #{_forward_q.1} parent=1 // pred_check_branch
      %63 = sbr.rel (0) target = $region37
    $region36: #{_forward_q.1} parent=1 // pred_region
      _
    $region37: #{_forward_q.1} parent=1 // pred_fallthru
      _
    // Predicated region
    $region38: #{_forward_q.1} parent=1 // pred_check
      _
    $region39: #{_forward_q.1} parent=1 // pred_check_branch
      %65 = sbr.rel (0) target = $region41
    $region40: #{_forward_q.1} parent=1 // pred_region
      %66 = dma.done [#allocation3], 2048
    $region41: #{_forward_q.1} parent=1 // pred_fallthru
      _
    // Predicated region
    $region42: #{_forward_q.1} parent=1 // pred_check
      _
    $region43: #{_forward_q.1} parent=1 // pred_check_branch
      %68 = sbr.rel (0) target = $region45
    $region44: #{_forward_q.1} parent=1 // pred_region
      %69 = dma.done [#allocation5], 2048
    $region45: #{_forward_q.1} parent=1 // pred_fallthru
      _
    // Predicated region
    $region46: #{_forward_q.1} parent=1 // pred_check
      _
    $region47: #{_forward_q.1} parent=1 // pred_check_branch
      %71 = sbr.rel (0) target = $region49
    $region48: #{_forward_q.1} parent=1 // pred_region
      %72 = dma.done [#allocation5], 2048
    $region49: #{_forward_q.1} parent=1 // pred_fallthru
      _
    %v73 = vld [vmem:[%s0] sm:$0xff]
    %v74 = vld [vmem:[%s1] sm:$0xf]
    %v75 = vld [vmem:[%s2] sm:$0x1]
    %v76 = vld [vmem:[#allocation2] sm:$0xff]
    %v77 = vld [vmem:[#allocation2 + $0x8] sm:$0xff]
    %v78 = vld [vmem:[#allocation2 + $0x10] sm:$0xff]
    %v79 = vld [vmem:[#allocation2 + $0x18] sm:$0xff]
    %v80 = vld [vmem:[#allocation2 + $0x20] sm:$0xff]
    %v81 = vld [vmem:[#allocation2 + $0x28] sm:$0xff]
    %v82 = vld [vmem:[#allocation2 + $0x30] sm:$0xff]
    %v83 = vld [vmem:[#allocation2 + $0x38] sm:$0xff]
    %v84 = vld [vmem:[#allocation2 + $0x40] sm:$0xff]
    %v85 = vld [vmem:[#allocation2 + $0x48] sm:$0xff]
    %v86 = vld [vmem:[#allocation2 + $0x50] sm:$0xff]
    %v87 = vld [vmem:[#allocation2 + $0x58] sm:$0xff]
    %v88 = vld [vmem:[#allocation2 + $0x60] sm:$0xff]
    %v89 = vld [vmem:[#allocation2 + $0x68] sm:$0xff]
    %v90 = vld [vmem:[#allocation2 + $0x70] sm:$0xff]
    %v91 = vld [vmem:[#allocation2 + $0x78] sm:$0xff]
    %v92 = vld [vmem:[%s4] sm:$0x1]
    %v93 = vld [vmem:[#allocation4] sm:$0xff]
    %v94 = vld [vmem:[#allocation4 + $0x8] sm:$0xff]
    %v95 = vld [vmem:[#allocation4 + $0x10] sm:$0xff]
    %v96 = vld [vmem:[#allocation4 + $0x18] sm:$0xff]
    %v97 = vld [vmem:[#allocation4 + $0x20] sm:$0xff]
    %v98 = vld [vmem:[#allocation4 + $0x28] sm:$0xff]
    %v99 = vld [vmem:[#allocation4 + $0x30] sm:$0xff]
    %v100 = vld [vmem:[#allocation4 + $0x38] sm:$0xff]
    %v101 = vld [vmem:[#allocation4 + $0x40] sm:$0xff]
    %v102 = vld [vmem:[#allocation4 + $0x48] sm:$0xff]
    %v103 = vld [vmem:[#allocation4 + $0x50] sm:$0xff]
    %v104 = vld [vmem:[#allocation4 + $0x58] sm:$0xff]
    %v105 = vld [vmem:[#allocation4 + $0x60] sm:$0xff]
    %v106 = vld [vmem:[#allocation4 + $0x68] sm:$0xff]
    %v107 = vld [vmem:[#allocation4 + $0x70] sm:$0xff]
    %v108 = vld [vmem:[#allocation4 + $0x78] sm:$0xff]
    %v109 = vld [vmem:[%s6] sm:$0x1]
    %v110 = vld [vmem:[#allocation6] sm:$0xff]
    %v111 = vld [vmem:[#allocation6 + $0x8] sm:$0xff]
    %v112 = vld [vmem:[#allocation6 + $0x10] sm:$0xff]
    %v113 = vld [vmem:[#allocation6 + $0x18] sm:$0xff]
    %v114 = vld [vmem:[#allocation6 + $0x20] sm:$0xff]
    %v115 = vld [vmem:[#allocation6 + $0x28] sm:$0xff]
    %v116 = vld [vmem:[#allocation6 + $0x30] sm:$0xff]
    %v117 = vld [vmem:[#allocation6 + $0x38] sm:$0xff]
    %v118 = vld [vmem:[#allocation6 + $0x40] sm:$0xff]
    %v119 = vld [vmem:[#allocation6 + $0x48] sm:$0xff]
    %v120 = vld [vmem:[#allocation6 + $0x50] sm:$0xff]
    %v121 = vld [vmem:[#allocation6 + $0x58] sm:$0xff]
    %v122 = vld [vmem:[#allocation6 + $0x60] sm:$0xff]
    %v123 = vld [vmem:[#allocation6 + $0x68] sm:$0xff]
    %v124 = vld [vmem:[#allocation6 + $0x70] sm:$0xff]
    %v125 = vld [vmem:[#allocation6 + $0x78] sm:$0xff]
    %v126 = vld [vmem:[%s8] sm:$0x1]
    %v128 = vlaneseq
    %v129 = vshrl.u32 %v128, 7
    %v130 = vsub.s32 0, %v129
    %v131 = vrot.slane %v75, %v130
    %vm133 = vcmask 31744
    %v135 = vsel %vm133, %v73, 0
    %vm137 = vcmask 1043456
    %v139 = vsel %vm137, %v74, 0
    %141 = vmatprep.subr.mxu0 0.0
    %142 = vmatpush1.msra.mxu0 %v139
    %143 = vmatprep.subr.mxu0 0.0
    %144 = vmatpush1.msra.mxu0 0.0
    %145 = vmatprep.subr.mxu0 0.0
    %146 = vmatpush1.msra.mxu0 0.0
    %147 = vmatprep.subr.mxu0 0.0
    %148 = vmatpush1.msra.mxu0 0.0
    %149 = vmatprep.subr.mxu0 0.0
    %150 = vmatpush1.msra.mxu0 0.0
    %151 = vmatprep.subr.mxu0 0.0
    %152 = vmatpush1.msra.mxu0 0.0
    %153 = vmatprep.subr.mxu0 0.0
    %154 = vmatpush1.msra.mxu0 0.0
    %155 = vmatprep.subr.mxu0 0.0
    %156 = vmatpush1.msra.mxu0 0.0
    %157 = vmatprep.subr.mxu0 0.0
    %158 = vmatpush1.msra.mxu0 0.0
    %159 = vmatprep.subr.mxu0 0.0
    %160 = vmatpush1.msra.mxu0 0.0
    %161 = vmatprep.subr.mxu0 0.0
    %162 = vmatpush1.msra.mxu0 0.0
    %163 = vmatprep.subr.mxu0 0.0
    %164 = vmatpush1.msra.mxu0 0.0
    %165 = vmatprep.subr.mxu0 0.0
    %166 = vmatpush1.msra.mxu0 0.0
    %167 = vmatprep.subr.mxu0 0.0
    %168 = vmatpush1.msra.mxu0 0.0
    %169 = vmatprep.subr.mxu0 0.0
    %170 = vmatpush1.msra.mxu0 0.0
    %171 = vmatprep.subr.mxu0 0.0
    %172 = vmatpush1.msra.mxu0 0.0
    %173 = vmatprep.subr.mxu0 0.0
    %174 = vmatpush1.msra.mxu0 0.0
    %175 = vmatprep.subr.mxu0 0.0
    %176 = vmatpush1.msra.mxu0 0.0
    %177 = vmatprep.subr.mxu0 0.0
    %178 = vmatpush1.msra.mxu0 0.0
    %179 = vmatprep.subr.mxu0 0.0
    %180 = vmatpush1.msra.mxu0 0.0
    %181 = vmatprep.subr.mxu0 0.0
    %182 = vmatpush1.msra.mxu0 0.0
    %183 = vmatprep.subr.mxu0 0.0
    %184 = vmatpush1.msra.mxu0 0.0
    %185 = vmatprep.subr.mxu0 0.0
    %186 = vmatpush1.msra.mxu0 0.0
    %187 = vmatprep.subr.mxu0 0.0
    %188 = vmatpush1.msra.mxu0 0.0
    %189 = vmatprep.subr.mxu0 0.0
    %190 = vmatpush1.msra.mxu0 0.0
    %191 = vmatprep.subr.mxu0 0.0
    %192 = vmatpush1.msra.mxu0 0.0
    %193 = vmatprep.subr.mxu0 0.0
    %194 = vmatpush1.msra.mxu0 0.0
    %195 = vmatprep.subr.mxu0 0.0
    %196 = vmatpush1.msra.mxu0 0.0
    %197 = vmatprep.subr.mxu0 0.0
    %198 = vmatpush1.msra.mxu0 0.0
    %199 = vmatprep.subr.mxu0 0.0
    %200 = vmatpush1.msra.mxu0 0.0
    %201 = vmatprep.subr.mxu0 0.0
    %202 = vmatpush1.msra.mxu0 0.0
    %203 = vmatprep.subr.mxu0 0.0
    %204 = vmatpush1.msra.mxu0 0.0
    %205 = vmatprep.mubr.f32.mxu0 0.0
    %206 = vmatmul.mubr.f32.gmra.mrb[0].mxu0 %v135
    %v207 = vpop.f32.mrb[0].mxu0
    %v208 = vadd.f32 %v131, %v207
    %v209 = vpop.f32.mrb[0].mxu0
    %210 = vdwg.mxu0
    %v211 = vtanh.pop %v208
    %v213 = vlaneseq
    %v214 = vshrl.u32 %v213, 7
    %v215 = vsub.s32 0, %v214
    %v216 = vrot.slane %v92, %v215
    %218 = vmatprep.subr.mxu0 0.0
    %219 = vmatpush1.msra.mxu0 %v76
    %220 = vmatprep.subr.mxu0 0.0
    %221 = vmatpush1.msra.mxu0 %v77
    %222 = vmatprep.subr.mxu0 0.0
    %223 = vmatpush1.msra.mxu0 %v78
    %224 = vmatprep.subr.mxu0 0.0
    %225 = vmatpush1.msra.mxu0 %v79
    %226 = vmatprep.subr.mxu0 0.0
    %227 = vmatpush1.msra.mxu0 %v80
    %228 = vmatprep.subr.mxu0 0.0
    %229 = vmatpush1.msra.mxu0 %v81
    %230 = vmatprep.subr.mxu0 0.0
    %231 = vmatpush1.msra.mxu0 %v82
    %232 = vmatprep.subr.mxu0 0.0
    %233 = vmatpush1.msra.mxu0 %v83
    %234 = vmatprep.subr.mxu0 0.0
    %235 = vmatpush1.msra.mxu0 %v84
    %236 = vmatprep.subr.mxu0 0.0
    %237 = vmatpush1.msra.mxu0 %v85
    %238 = vmatprep.subr.mxu0 0.0
    %239 = vmatpush1.msra.mxu0 %v86
    %240 = vmatprep.subr.mxu0 0.0
    %241 = vmatpush1.msra.mxu0 %v87
    %242 = vmatprep.subr.mxu0 0.0
    %243 = vmatpush1.msra.mxu0 %v88
    %244 = vmatprep.subr.mxu0 0.0
    %245 = vmatpush1.msra.mxu0 %v89
    %246 = vmatprep.subr.mxu0 0.0
    %247 = vmatpush1.msra.mxu0 %v90
    %248 = vmatprep.subr.mxu0 0.0
    %249 = vmatpush1.msra.mxu0 %v91
    %250 = vmatprep.subr.mxu0 0.0
    %251 = vmatpush1.msra.mxu0 0.0
    %252 = vmatprep.subr.mxu0 0.0
    %253 = vmatpush1.msra.mxu0 0.0
    %254 = vmatprep.subr.mxu0 0.0
    %255 = vmatpush1.msra.mxu0 0.0
    %256 = vmatprep.subr.mxu0 0.0
    %257 = vmatpush1.msra.mxu0 0.0
    %258 = vmatprep.subr.mxu0 0.0
    %259 = vmatpush1.msra.mxu0 0.0
    %260 = vmatprep.subr.mxu0 0.0
    %261 = vmatpush1.msra.mxu0 0.0
    %262 = vmatprep.subr.mxu0 0.0
    %263 = vmatpush1.msra.mxu0 0.0
    %264 = vmatprep.subr.mxu0 0.0
    %265 = vmatpush1.msra.mxu0 0.0
    %266 = vmatprep.subr.mxu0 0.0
    %267 = vmatpush1.msra.mxu0 0.0
    %268 = vmatprep.subr.mxu0 0.0
    %269 = vmatpush1.msra.mxu0 0.0
    %270 = vmatprep.subr.mxu0 0.0
    %271 = vmatpush1.msra.mxu0 0.0
    %272 = vmatprep.subr.mxu0 0.0
    %273 = vmatpush1.msra.mxu0 0.0
    %274 = vmatprep.subr.mxu0 0.0
    %275 = vmatpush1.msra.mxu0 0.0
    %276 = vmatprep.subr.mxu0 0.0
    %277 = vmatpush1.msra.mxu0 0.0
    %278 = vmatprep.subr.mxu0 0.0
    %279 = vmatpush1.msra.mxu0 0.0
    %280 = vmatprep.subr.mxu0 0.0
    %281 = vmatpush1.msra.mxu0 0.0
    %282 = vmatprep.mubr.f32.mxu0 0.0
    %283 = vmatmul.mubr.f32.gmra.mrb[0].mxu0 %v211
    %v284 = vpop.f32.mrb[0].mxu0
    %v285 = vadd.f32 %v216, %v284
    %v286 = vpop.f32.mrb[0].mxu0
    %287 = vdwg.mxu0
    %v288 = vtanh.pop %v285
    %v290 = vlaneseq
    %v291 = vshrl.u32 %v290, 7
    %v292 = vsub.s32 0, %v291
    %v293 = vrot.slane %v109, %v292
    %295 = vmatprep.subr.mxu0 0.0
    %296 = vmatpush1.msra.mxu0 %v93
    %297 = vmatprep.subr.mxu0 0.0
    %298 = vmatpush1.msra.mxu0 %v94
    %299 = vmatprep.subr.mxu0 0.0
    %300 = vmatpush1.msra.mxu0 %v95
    %301 = vmatprep.subr.mxu0 0.0
    %302 = vmatpush1.msra.mxu0 %v96
    %303 = vmatprep.subr.mxu0 0.0
    %304 = vmatpush1.msra.mxu0 %v97
    %305 = vmatprep.subr.mxu0 0.0
    %306 = vmatpush1.msra.mxu0 %v98
    %307 = vmatprep.subr.mxu0 0.0
    %308 = vmatpush1.msra.mxu0 %v99
    %309 = vmatprep.subr.mxu0 0.0
    %310 = vmatpush1.msra.mxu0 %v100
    %311 = vmatprep.subr.mxu0 0.0
    %312 = vmatpush1.msra.mxu0 %v101
    %313 = vmatprep.subr.mxu0 0.0
    %314 = vmatpush1.msra.mxu0 %v102
    %315 = vmatprep.subr.mxu0 0.0
    %316 = vmatpush1.msra.mxu0 %v103
    %317 = vmatprep.subr.mxu0 0.0
    %318 = vmatpush1.msra.mxu0 %v104
    %319 = vmatprep.subr.mxu0 0.0
    %320 = vmatpush1.msra.mxu0 %v105
    %321 = vmatprep.subr.mxu0 0.0
    %322 = vmatpush1.msra.mxu0 %v106
    %323 = vmatprep.subr.mxu0 0.0
    %324 = vmatpush1.msra.mxu0 %v107
    %325 = vmatprep.subr.mxu0 0.0
    %326 = vmatpush1.msra.mxu0 %v108
    %327 = vmatprep.subr.mxu0 0.0
    %328 = vmatpush1.msra.mxu0 0.0
    %329 = vmatprep.subr.mxu0 0.0
    %330 = vmatpush1.msra.mxu0 0.0
    %331 = vmatprep.subr.mxu0 0.0
    %332 = vmatpush1.msra.mxu0 0.0
    %333 = vmatprep.subr.mxu0 0.0
    %334 = vmatpush1.msra.mxu0 0.0
    %335 = vmatprep.subr.mxu0 0.0
    %336 = vmatpush1.msra.mxu0 0.0
    %337 = vmatprep.subr.mxu0 0.0
    %338 = vmatpush1.msra.mxu0 0.0
    %339 = vmatprep.subr.mxu0 0.0
    %340 = vmatpush1.msra.mxu0 0.0
    %341 = vmatprep.subr.mxu0 0.0
    %342 = vmatpush1.msra.mxu0 0.0
    %343 = vmatprep.subr.mxu0 0.0
    %344 = vmatpush1.msra.mxu0 0.0
    %345 = vmatprep.subr.mxu0 0.0
    %346 = vmatpush1.msra.mxu0 0.0
    %347 = vmatprep.subr.mxu0 0.0
    %348 = vmatpush1.msra.mxu0 0.0
    %349 = vmatprep.subr.mxu0 0.0
    %350 = vmatpush1.msra.mxu0 0.0
    %351 = vmatprep.subr.mxu0 0.0
    %352 = vmatpush1.msra.mxu0 0.0
    %353 = vmatprep.subr.mxu0 0.0
    %354 = vmatpush1.msra.mxu0 0.0
    %355 = vmatprep.subr.mxu0 0.0
    %356 = vmatpush1.msra.mxu0 0.0
    %357 = vmatprep.subr.mxu0 0.0
    %358 = vmatpush1.msra.mxu0 0.0
    %359 = vmatprep.mubr.f32.mxu0 0.0
    %360 = vmatmul.mubr.f32.gmra.mrb[0].mxu0 %v288
    %v361 = vpop.f32.mrb[0].mxu0
    %v362 = vadd.f32 %v293, %v361
    %v363 = vpop.f32.mrb[0].mxu0
    %364 = vdwg.mxu0
    %v365 = vtanh.pop %v362
    %v367 = vlaneseq
    %v368 = vshrl.u32 %v367, 7
    %v369 = vsub.s32 0, %v368
    %v370 = vrot.slane %v126, %v369
    %372 = vmatprep.subr.mxu0 0.0
    %373 = vmatpush1.msra.mxu0 %v110
    %374 = vmatprep.subr.mxu0 0.0
    %375 = vmatpush1.msra.mxu0 %v111
    %376 = vmatprep.subr.mxu0 0.0
    %377 = vmatpush1.msra.mxu0 %v112
    %378 = vmatprep.subr.mxu0 0.0
    %379 = vmatpush1.msra.mxu0 %v113
    %380 = vmatprep.subr.mxu0 0.0
    %381 = vmatpush1.msra.mxu0 %v114
    %382 = vmatprep.subr.mxu0 0.0
    %383 = vmatpush1.msra.mxu0 %v115
    %384 = vmatprep.subr.mxu0 0.0
    %385 = vmatpush1.msra.mxu0 %v116
    %386 = vmatprep.subr.mxu0 0.0
    %387 = vmatpush1.msra.mxu0 %v117
    %388 = vmatprep.subr.mxu0 0.0
    %389 = vmatpush1.msra.mxu0 %v118
    %390 = vmatprep.subr.mxu0 0.0
    %391 = vmatpush1.msra.mxu0 %v119
    %392 = vmatprep.subr.mxu0 0.0
    %393 = vmatpush1.msra.mxu0 %v120
    %394 = vmatprep.subr.mxu0 0.0
    %395 = vmatpush1.msra.mxu0 %v121
    %396 = vmatprep.subr.mxu0 0.0
    %397 = vmatpush1.msra.mxu0 %v122
    %398 = vmatprep.subr.mxu0 0.0
    %399 = vmatpush1.msra.mxu0 %v123
    %400 = vmatprep.subr.mxu0 0.0
    %401 = vmatpush1.msra.mxu0 %v124
    %402 = vmatprep.subr.mxu0 0.0
    %403 = vmatpush1.msra.mxu0 %v125
    %404 = vmatprep.subr.mxu0 0.0
    %405 = vmatpush1.msra.mxu0 0.0
    %406 = vmatprep.subr.mxu0 0.0
    %407 = vmatpush1.msra.mxu0 0.0
    %408 = vmatprep.subr.mxu0 0.0
    %409 = vmatpush1.msra.mxu0 0.0
    %410 = vmatprep.subr.mxu0 0.0
    %411 = vmatpush1.msra.mxu0 0.0
    %412 = vmatprep.subr.mxu0 0.0
    %413 = vmatpush1.msra.mxu0 0.0
    %414 = vmatprep.subr.mxu0 0.0
    %415 = vmatpush1.msra.mxu0 0.0
    %416 = vmatprep.subr.mxu0 0.0
    %417 = vmatpush1.msra.mxu0 0.0
    %418 = vmatprep.subr.mxu0 0.0
    %419 = vmatpush1.msra.mxu0 0.0
    %420 = vmatprep.subr.mxu0 0.0
    %421 = vmatpush1.msra.mxu0 0.0
    %422 = vmatprep.subr.mxu0 0.0
    %423 = vmatpush1.msra.mxu0 0.0
    %424 = vmatprep.subr.mxu0 0.0
    %425 = vmatpush1.msra.mxu0 0.0
    %426 = vmatprep.subr.mxu0 0.0
    %427 = vmatpush1.msra.mxu0 0.0
    %428 = vmatprep.subr.mxu0 0.0
    %429 = vmatpush1.msra.mxu0 0.0
    %430 = vmatprep.subr.mxu0 0.0
    %431 = vmatpush1.msra.mxu0 0.0
    %432 = vmatprep.subr.mxu0 0.0
    %433 = vmatpush1.msra.mxu0 0.0
    %434 = vmatprep.subr.mxu0 0.0
    %435 = vmatpush1.msra.mxu0 0.0
    %436 = vmatprep.mubr.f32.mxu0 0.0
    %437 = vmatmul.mubr.f32.gmra.mrb[0].mxu0 %v365
    %v438 = vpop.f32.mrb[0].mxu0
    %v439 = vadd.f32 %v370, %v438
    %v440 = vpop.f32.mrb[0].mxu0
    %441 = vdwg.mxu0
    %442 = vst [vmem:[%s9] sm:$0xff] %v439
    // Predicated region
    $region50: #{_forward_q.1} parent=1 // pred_check
      _
    $region51: #{_forward_q.1} parent=1 // pred_check_branch
      %444 = sbr.rel (0) target = $region53
    $region52: #{_forward_q.1} parent=1 // pred_region
      _
    $region53: #{_forward_q.1} parent=1 // pred_fallthru
      _
    // Predicated region
    $region54: #{_forward_q.1} parent=1 // pred_check
      _
    $region55: #{_forward_q.1} parent=1 // pred_check_branch
      %446 = sbr.rel (0) target = $region57
    $region56: #{_forward_q.1} parent=1 // pred_region
      _
    $region57: #{_forward_q.1} parent=1 // pred_fallthru
      _
    %447 = vsyncpa [#allocation3], 1
    %448 = vsyncpa [#allocation5], 1

</llo_original>
